<compile_context>
chip_gen: v5e
topology: v5e:2x2
jax: 0.10.0
libtpu: 0.0.40
codegen_flags: <defaults>
</compile_context>

<pallas_src>
import functools

import jax
import jax.numpy as jnp
from jax import lax
from jax.experimental import pallas as pl
from jax.experimental.pallas import tpu as pltpu

_EPS = 1e-5

# VMEM budget for the double-buffered pipelined tiles (inputs + output).  24 MiB of streams
# (+ headroom) stays well under v7x's 64 MiB physical VMEM and past the ~512-row roofline knee
# measured on v5e/v6e for mem-bound elementwise kernels.
_VMEM_STREAM_BUDGET = 24 * 1024 * 1024
_VMEM_LIMIT_BYTES = 48 * 1024 * 1024
_MAX_TILE_ROWS = 1024


def _sublayer_conn_kernel(x_ref, s_ref, *rest, inv_keep: float, has_mask: bool):
    """Fused dropout * residual * LayerNorm over the last axis.

    x_ref, s_ref, o_ref : [tile_rows, H] in the caller's dtype
    m_ref (optional)    : [tile_rows, H] keep-mask (0/1) in the caller's dtype
    g_ref, b_ref        : [1, H] f32 LayerNorm affine params
    """
    if has_mask:
        m_ref, g_ref, b_ref, o_ref = rest
    else:
        g_ref, b_ref, o_ref = rest

    x = x_ref[...].astype(jnp.float32)
    s = s_ref[...].astype(jnp.float32)
    if has_mask:
        # Inverted dropout: keep-mask * 1/(1-p); mask*inv_keep is exactly 0 or inv_keep.
        s = s * (m_ref[...].astype(jnp.float32) * inv_keep)

    h = x + s                                            # residual add
    mean = jnp.mean(h, axis=-1, keepdims=True)           # LayerNorm stats over hidden (f32)
    c = h - mean
    var = jnp.mean(c * c, axis=-1, keepdims=True)
    inv = lax.rsqrt(var + _EPS)
    y = c * inv * g_ref[...].astype(jnp.float32) + b_ref[...].astype(jnp.float32)
    o_ref[...] = y.astype(o_ref.dtype)                   # store in the I/O dtype


def _pick_tile_rows(rows: int, H: int, itemsize: int, n_streams: int) -> int:
    """Largest multiple-of-8 row tile whose double-buffered streams fit the VMEM budget."""
    per_row = n_streams * 2 * H * itemsize               # n streams, 2 buffers each
    t = _VMEM_STREAM_BUDGET // max(per_row, 1)
    t = int(min(t, _MAX_TILE_ROWS))
    t = max(8, (t // 8) * 8)
    # If the whole problem fits in one tile, use the full row extent (allowed even if not a
    # multiple of 8, since the block then equals the full array dim).
    return rows if rows <= t else t


def sublayer_connection(x, sublayer_out, gamma, beta, rng_key=None, *,
                        p: float = 0.1, training: bool = True):
    """Returns LayerNorm(x + Dropout(sublayer_out)).  x, sublayer_out: [..., H]."""
    orig_shape = x.shape
    H = orig_shape[-1]
    dtype = x.dtype
    apply_dropout = bool(training) and p > 0.0
    if apply_dropout and rng_key is None:
        raise ValueError("rng_key is required when training with p > 0")

    # NOTE: for real transformer widths keep H a multiple of 128 so output stores are
    # lane-dense (sub-128 H forces masked partial vector stores).
    x2 = x.reshape(-1, H)
    s2 = sublayer_out.astype(dtype).reshape(-1, H)
    rows = x2.shape[0]

    g2 = gamma.reshape(1, H).astype(jnp.float32)
    b2 = beta.reshape(1, H).astype(jnp.float32)

    itemsize = jnp.dtype(dtype).itemsize
    n_streams = 4 if apply_dropout else 3                # x, s, (mask), out
    tile_rows = _pick_tile_rows(rows, H, itemsize, n_streams)
    grid = (pl.cdiv(rows, tile_rows),)

    row_spec = pl.BlockSpec((tile_rows, H), lambda i: (i, 0))
    param_spec = pl.BlockSpec((1, H), lambda i: (0, 0))

    inputs = [x2, s2]
    in_specs = [row_spec, row_spec]
    if apply_dropout:
        keep = jax.random.bernoulli(rng_key, 1.0 - p, orig_shape)
        inputs.append(keep.astype(dtype).reshape(-1, H))
        in_specs.append(row_spec)
    inputs += [g2, b2]
    in_specs += [param_spec, param_spec]

    kernel = functools.partial(
        _sublayer_conn_kernel,
        inv_keep=float(1.0 / (1.0 - p)) if apply_dropout else 1.0,
        has_mask=apply_dropout)

    in_bytes = sum(int(a.size) * jnp.dtype(a.dtype).itemsize for a in inputs)
    out_bytes = rows * H * itemsize
    cost = pl.CostEstimate(flops=9 * rows * H,
                           transcendentals=rows,
                           bytes_accessed=in_bytes + out_bytes)

    out = pl.pallas_call(
        kernel,
        out_shape=jax.ShapeDtypeStruct((rows, H), dtype),
        grid=grid,
        in_specs=in_specs,
        out_specs=row_spec,
        compiler_params=pltpu.CompilerParams(
            dimension_semantics=("parallel",),            # tiles independent -> megacore-safe
            vmem_limit_bytes=_VMEM_LIMIT_BYTES),
        cost_estimate=cost,
    )(*inputs)

    return out.reshape(orig_shape)


if __name__ == "__main__":
    B, S, H = 2, 8, 32
    key = jax.random.PRNGKey(0)
    kx, kw, kb, kg, kbeta, kdrop = jax.random.split(key, 6)

    x = jax.random.normal(kx, (B, S, H), dtype=jnp.float32)

    # Deterministic "sublayer": a small Linear(H, H) applied in plain JAX (glue).
    W = jax.random.normal(kw, (H, H), dtype=jnp.float32) * 0.05
    bias = jax.random.normal(kb, (H,), dtype=jnp.float32) * 0.05
    sub_out = jnp.einsum("bsh,hk->bsk", x, W) + bias

    # LayerNorm affine params (deterministic).
    gamma = jnp.ones((H,), jnp.float32) + 0.01 * jax.random.normal(kg, (H,), jnp.float32)
    beta = 0.01 * jax.random.normal(kbeta, (H,), jnp.float32)

    p = 0.1

    def ln_ref(h):
        mu = jnp.mean(h, axis=-1, keepdims=True)
        var = jnp.mean((h - mu) ** 2, axis=-1, keepdims=True)
        return (h - mu) * lax.rsqrt(var + _EPS) * gamma + beta

    # Training mode (dropout active, mask drawn from kdrop).
    y_train = sublayer_connection(x, sub_out, gamma, beta, rng_key=kdrop, p=p, training=True)
    jax.block_until_ready(y_train)

    keep = jax.random.bernoulli(kdrop, 1.0 - p, x.shape)
    ref_train = ln_ref(x + jnp.where(keep, sub_out, 0.0) * (1.0 / (1.0 - p)))
    assert jnp.allclose(y_train, ref_train, atol=1e-5, rtol=1e-5)

    # Eval mode (dropout = identity) against the pure-JAX reference.
    y_eval = sublayer_connection(x, sub_out, gamma, beta, p=p, training=False)
    ref_eval = ln_ref(x + sub_out)
    assert jnp.allclose(y_eval, ref_eval, atol=1e-5, rtol=1e-5)

    print("KERNEL_OK")
</pallas_src>

<mosaic_0001>
module attributes {stable_mosaic.version = 11 : i64} {
  func.func @_sublayer_conn_kernel(%arg0: i32, %arg1: memref<16x32xf32, #tpu.memory_space<vmem>>, %arg2: memref<16x32xf32, #tpu.memory_space<vmem>>, %arg3: memref<16x32xf32, #tpu.memory_space<vmem>>, %arg4: memref<1x32xf32, #tpu.memory_space<vmem>>, %arg5: memref<1x32xf32, #tpu.memory_space<vmem>>, %arg6: memref<16x32xf32, #tpu.memory_space<vmem>>) attributes {dimension_semantics = [#tpu.dimension_semantics<parallel>], iteration_bounds = array<i64: 1>, scalar_prefetch = 0 : i64, scratch_operands = 0 : i64, tpu.core_type = #tpu.core_type<tc>, window_params = [{transform_indices = @transform_0, window_bounds = array<i64: 16, 32>}, {transform_indices = @transform_1, window_bounds = array<i64: 16, 32>}, {transform_indices = @transform_2, window_bounds = array<i64: 16, 32>}, {pipeline_mode = #tpu.pipeline_mode<synchronous>, transform_indices = @transform_3, window_bounds = array<i64: 1, 32>}, {pipeline_mode = #tpu.pipeline_mode<synchronous>, transform_indices = @transform_4, window_bounds = array<i64: 1, 32>}, {transform_indices = @transform_5, window_bounds = array<i64: 16, 32>}]} {
    %c0 = arith.constant 0 : index
    %c0_0 = arith.constant 0 : index
    %0 = vector.load %arg1[%c0, %c0_0] : memref<16x32xf32, #tpu.memory_space<vmem>>, vector<16x32xf32>
    %c0_1 = arith.constant 0 : index
    %c0_2 = arith.constant 0 : index
    %1 = vector.load %arg2[%c0_1, %c0_2] : memref<16x32xf32, #tpu.memory_space<vmem>>, vector<16x32xf32>
    %c0_3 = arith.constant 0 : index
    %c0_4 = arith.constant 0 : index
    %2 = vector.load %arg3[%c0_3, %c0_4] : memref<16x32xf32, #tpu.memory_space<vmem>>, vector<16x32xf32>
    %cst = arith.constant 1.11111116 : f32
    %3 = vector.broadcast %cst : f32 to vector<16x32xf32>
    %4 = arith.mulf %2, %3 : vector<16x32xf32>
    %5 = arith.mulf %1, %4 : vector<16x32xf32>
    %6 = arith.addf %0, %5 : vector<16x32xf32>
    %cst_5 = arith.constant dense<0.000000e+00> : vector<16xf32>
    %7 = vector.multi_reduction <add>, %6, %cst_5 [1] : vector<16x32xf32> to vector<16xf32>
    %8 = vector.shape_cast %7 : vector<16xf32> to vector<16x1xf32>
    %cst_6 = arith.constant 3.200000e+01 : f32
    %9 = vector.broadcast %cst_6 : f32 to vector<16x1xf32>
    %10 = arith.divf %8, %9 : vector<16x1xf32>
    %11 = vector.broadcast %10 : vector<16x1xf32> to vector<16x32xf32>
    %12 = arith.subf %6, %11 : vector<16x32xf32>
    %13 = arith.mulf %12, %12 : vector<16x32xf32>
    %cst_7 = arith.constant dense<0.000000e+00> : vector<16xf32>
    %14 = vector.multi_reduction <add>, %13, %cst_7 [1] : vector<16x32xf32> to vector<16xf32>
    %15 = vector.shape_cast %14 : vector<16xf32> to vector<16x1xf32>
    %cst_8 = arith.constant 3.200000e+01 : f32
    %16 = vector.broadcast %cst_8 : f32 to vector<16x1xf32>
    %17 = arith.divf %15, %16 : vector<16x1xf32>
    %cst_9 = arith.constant 9.99999974E-6 : f32
    %18 = vector.broadcast %cst_9 : f32 to vector<16x1xf32>
    %19 = arith.addf %17, %18 : vector<16x1xf32>
    %20 = math.rsqrt %19 : vector<16x1xf32>
    %21 = vector.broadcast %20 : vector<16x1xf32> to vector<16x32xf32>
    %22 = arith.mulf %12, %21 : vector<16x32xf32>
    %c0_10 = arith.constant 0 : index
    %c0_11 = arith.constant 0 : index
    %23 = vector.load %arg4[%c0_10, %c0_11] : memref<1x32xf32, #tpu.memory_space<vmem>>, vector<1x32xf32>
    %24 = vector.broadcast %23 : vector<1x32xf32> to vector<16x32xf32>
    %25 = arith.mulf %22, %24 : vector<16x32xf32>
    %c0_12 = arith.constant 0 : index
    %c0_13 = arith.constant 0 : index
    %26 = vector.load %arg5[%c0_12, %c0_13] : memref<1x32xf32, #tpu.memory_space<vmem>>, vector<1x32xf32>
    %27 = vector.broadcast %26 : vector<1x32xf32> to vector<16x32xf32>
    %28 = arith.addf %25, %27 : vector<16x32xf32>
    %c0_14 = arith.constant 0 : index
    %c0_15 = arith.constant 0 : index
    %29 = vector.load %arg6[%c0_14, %c0_15] : memref<16x32xf32, #tpu.memory_space<vmem>>, vector<16x32xf32>
    tpu.vector_store %arg6[%c0_14, %c0_15], %28 {strides = array<i32>} : memref<16x32xf32, #tpu.memory_space<vmem>>, vector<16x32xf32>,
    return
  }
  func.func @transform_0(%arg0: i32) -> (i32, i32) {
    %c0_i32 = arith.constant 0 : i32
    %c0_i32_0 = arith.constant 0 : i32
    return %arg0, %c0_i32 : i32, i32
  }
  func.func @transform_1(%arg0: i32) -> (i32, i32) {
    %c0_i32 = arith.constant 0 : i32
    %c0_i32_0 = arith.constant 0 : i32
    return %arg0, %c0_i32 : i32, i32
  }
  func.func @transform_2(%arg0: i32) -> (i32, i32) {
    %c0_i32 = arith.constant 0 : i32
    %c0_i32_0 = arith.constant 0 : i32
    return %arg0, %c0_i32 : i32, i32
  }
  func.func @transform_3(%arg0: i32) -> (i32, i32) {
    %c0_i32 = arith.constant 0 : i32
    %c0_i32_0 = arith.constant 0 : i32
    %c0_i32_1 = arith.constant 0 : i32
    return %c0_i32, %c0_i32_0 : i32, i32
  }
  func.func @transform_4(%arg0: i32) -> (i32, i32) {
    %c0_i32 = arith.constant 0 : i32
    %c0_i32_0 = arith.constant 0 : i32
    %c0_i32_1 = arith.constant 0 : i32
    return %c0_i32, %c0_i32_0 : i32, i32
  }
  func.func @transform_5(%arg0: i32) -> (i32, i32) {
    %c0_i32 = arith.constant 0 : i32
    %c0_i32_0 = arith.constant 0 : i32
    return %arg0, %c0_i32 : i32, i32
  }
}

</mosaic_0001>

<llo_original>
// kernel: tpu_custom_call.1
$region0: #{tpu_custom_call.1}
  #allocation0 [shape = 'u32[]', space=smem, size = 0x4, offset = 0x4, fixed_abs, tag = 'smem constant byte address 0x4 - core index']
  #allocation1 [shape = 'u32[72,128]{1,0:T(1,128)}', space=vmem, size = 0x9000, scoped, tag = 'internal scratch']
  %s0 = inlined_call_operand.hbm [shape: f32[16,32], index: 0, kind: input, shape index: {}]
  %s1 = inlined_call_operand.hbm [shape: f32[16,32], index: 1, kind: input, shape index: {}]
  %s2 = inlined_call_operand.hbm [shape: f32[16,32], index: 2, kind: input, shape index: {}]
  %s3 = inlined_call_operand.vmem [shape: f32[1,32], index: 3, kind: input, shape index: {}]
  %s4 = inlined_call_operand.vmem [shape: f32[1,32], index: 4, kind: input, shape index: {}]
  %s5 = inlined_call_operand.hbm [shape: f32[16,32], index: 5, kind: output, shape index: {}]
  %s6 = sld [smem:[#allocation0]]
  $region42: #{tpu_custom_call.1} parent=0
    _
  %s8 = ssub.s32 1, %s6
  %s9 = scalar_select 0, %s8, %s6
  $region1: #{tpu_custom_call.1} parent=0
    #allocation2 [shape = 'u8[8192]{0}', space=vmem, size = 0x2000, scoped, tag = 'input window, operand 0, single buffered']
    #allocation3 [shape = 's32[1]{0}', space=sflag, size = 0x4, scoped, tag = 'scoped memory for tpu_custom_call.1']
    #allocation4 [shape = 's32[1]{0}', space=sflag, size = 0x4, scoped, tag = 'scoped memory for tpu_custom_call.1']
    #allocation5 [shape = 'u8[8192]{0}', space=vmem, size = 0x2000, scoped, tag = 'input window, operand 1, single buffered']
    #allocation6 [shape = 's32[1]{0}', space=sflag, size = 0x4, scoped, tag = 'scoped memory for tpu_custom_call.1']
    #allocation7 [shape = 'u8[8192]{0}', space=vmem, size = 0x2000, scoped, tag = 'input window, operand 2, single buffered']
    #allocation8 [shape = 'u8[8192]{0}', space=vmem, size = 0x2000, scoped, tag = 'output window, operand 0, single buffered']
    %10 = vsyncpa [#allocation3], 0
    %11 = vsyncpa [#allocation6], 0
    %12 = vsyncpa [#allocation4], 0
    // Predicated region
    $region2: #{tpu_custom_call.1} parent=1 // pred_check
      _
    $region3: #{tpu_custom_call.1} parent=1 // pred_check_branch
      %14 = sbr.rel (0) target = $region5
    $region4: #{tpu_custom_call.1} parent=1 // pred_region
      %16 = vsyncadd [#allocation3], 0
      %s17 = sshll.u32 %s0, 4
      %s18 = int_to_ptr.hbm [resolvable:$true] %s17
      %s19 = sshll.u32 [#allocation2], 4
      %s20 = int_to_ptr.vmem [resolvable:$true] %s19
      %25 = dma.hbm_to_vmem [thread:$0]  %s18, 256, %s20, [#allocation3], 128, 128, 8
    $region5: #{tpu_custom_call.1} parent=1 // pred_fallthru
      _
    // Predicated region
    $region6: #{tpu_custom_call.1} parent=1 // pred_check
      _
    $region7: #{tpu_custom_call.1} parent=1 // pred_check_branch
      %27 = sbr.rel (0) target = $region9
    $region8: #{tpu_custom_call.1} parent=1 // pred_region
      %29 = vsyncadd [#allocation6], 0
      %s30 = sshll.u32 %s1, 4
      %s31 = int_to_ptr.hbm [resolvable:$true] %s30
      %s32 = sshll.u32 [#allocation5], 4
      %s33 = int_to_ptr.vmem [resolvable:$true] %s32
      %38 = dma.hbm_to_vmem [thread:$0]  %s31, 256, %s33, [#allocation6], 128, 128, 8
    $region9: #{tpu_custom_call.1} parent=1 // pred_fallthru
      _
    // Predicated region
    $region10: #{tpu_custom_call.1} parent=1 // pred_check
      _
    $region11: #{tpu_custom_call.1} parent=1 // pred_check_branch
      %40 = sbr.rel (0) target = $region13
    $region12: #{tpu_custom_call.1} parent=1 // pred_region
      %42 = vsyncadd [#allocation6], 0
      %s43 = sshll.u32 %s2, 4
      %s44 = int_to_ptr.hbm [resolvable:$true] %s43
      %s45 = sshll.u32 [#allocation7], 4
      %s46 = int_to_ptr.vmem [resolvable:$true] %s45
      %51 = dma.hbm_to_vmem [thread:$0]  %s44, 256, %s46, [#allocation6], 128, 128, 8
    $region13: #{tpu_custom_call.1} parent=1 // pred_fallthru
      _
    // Predicated region
    $region14: #{tpu_custom_call.1} parent=1 // pred_check
      _
    $region15: #{tpu_custom_call.1} parent=1 // pred_check_branch
      %53 = sbr.rel (0) target = $region17
    $region16: #{tpu_custom_call.1} parent=1 // pred_region
      _
    $region17: #{tpu_custom_call.1} parent=1 // pred_fallthru
      _
    // Predicated region
    $region18: #{tpu_custom_call.1} parent=1 // pred_check
      _
    $region19: #{tpu_custom_call.1} parent=1 // pred_check_branch
      %55 = sbr.rel (0) target = $region21
    $region20: #{tpu_custom_call.1} parent=1 // pred_region
      _
    $region21: #{tpu_custom_call.1} parent=1 // pred_fallthru
      _
    // Predicated region
    $region22: #{tpu_custom_call.1} parent=1 // pred_check
      _
    $region23: #{tpu_custom_call.1} parent=1 // pred_check_branch
      %57 = sbr.rel (0) target = $region25
    $region24: #{tpu_custom_call.1} parent=1 // pred_region
      %59 = dma.done [#allocation3], 256
    $region25: #{tpu_custom_call.1} parent=1 // pred_fallthru
      _
    // Predicated region
    $region26: #{tpu_custom_call.1} parent=1 // pred_check
      _
    $region27: #{tpu_custom_call.1} parent=1 // pred_check_branch
      %61 = sbr.rel (0) target = $region29
    $region28: #{tpu_custom_call.1} parent=1 // pred_region
      %63 = dma.done [#allocation6], 256
    $region29: #{tpu_custom_call.1} parent=1 // pred_fallthru
      _
    // Predicated region
    $region30: #{tpu_custom_call.1} parent=1 // pred_check
      _
    $region31: #{tpu_custom_call.1} parent=1 // pred_check_branch
      %65 = sbr.rel (0) target = $region33
    $region32: #{tpu_custom_call.1} parent=1 // pred_region
      %67 = dma.done [#allocation6], 256
    $region33: #{tpu_custom_call.1} parent=1 // pred_fallthru
      _
    %v68 = vld [vmem:[#allocation2] sm:$0xff]
    %v69 = vld [vmem:[#allocation2 + $0x8] sm:$0xff]
    %v70 = vld [vmem:[#allocation5] sm:$0xff]
    %v71 = vld [vmem:[#allocation5 + $0x8] sm:$0xff]
    %v72 = vld [vmem:[#allocation7] sm:$0xff]
    %v73 = vld [vmem:[#allocation7 + $0x8] sm:$0xff]
    %v74 = vmul.f32 %v72, 1.1111112
    %v75 = vmul.f32 %v73, 1.1111112
    %v76 = vmul.f32 %v70, %v74
    %v77 = vmul.f32 %v71, %v75
    %v78 = vadd.f32 %v68, %v76
    %v79 = vadd.f32 %v69, %v77
    %vm80 = vcmask 261120
    %v81 = vsel %vm80, %v78, 0.0
    %82 = vadd.xlane.f32.xlu0 %v81
    %v83 = vpop.xlane.xlu0 %82
    %v84 = vsel %vm80, %v79, 0.0
    %85 = vadd.xlane.f32.xlu0 %v84
    %v86 = vpop.xlane.xlu0 %85
    %v87 = vrcp.pop 32.0
    %v88 = vmul.f32 32.0, %v87
    %v89 = vsub.f32 1.0, %v88
    %v90 = vmul.f32 %v87, %v89
    %v91 = vadd.f32 %v87, %v90
    %vm92 = vweird.f32 %v87
    %v93 = vsel %vm92, %v87, %v91
    %v94 = vmul.f32 %v83, %v93
    %v95 = vmul.f32 %v86, %v93
    %v96 = vsub.f32 %v78, %v94
    %v97 = vsub.f32 %v79, %v95
    %v98 = vmul.f32 %v96, %v96
    %v99 = vmul.f32 %v97, %v97
    %v100 = vsel %vm80, %v98, 0.0
    %101 = vadd.xlane.f32.xlu0 %v100
    %v102 = vpop.xlane.xlu0 %101
    %v103 = vsel %vm80, %v99, 0.0
    %104 = vadd.xlane.f32.xlu0 %v103
    %v105 = vpop.xlane.xlu0 %104
    %v106 = vmul.f32 %v102, %v93
    %v107 = vmul.f32 %v105, %v93
    %v108 = vadd.f32 %v106, 1e-05
    %v109 = vadd.f32 %v107, 1e-05
    %v110 = vrsqrt.pop %v108
    %v111 = vmul.f32 %v110, %v108
    %v112 = vmul.f32 %v111, %v110
    %v113 = vmul.f32 0.5, %v112
    %v114 = vsub.f32 1.5, %v113
    %v115 = vmul.f32 %v110, %v114
    %vm116 = vweird.f32 %v108
    %vm117 = vweird.f32 %v110
    %vm118 = vmor %vm116, %vm117
    %v119 = vsel %vm118, %v110, %v115
    %v120 = vrsqrt.pop %v109
    %v121 = vmul.f32 %v120, %v109
    %v122 = vmul.f32 %v121, %v120
    %v123 = vmul.f32 0.5, %v122
    %v124 = vsub.f32 1.5, %v123
    %v125 = vmul.f32 %v120, %v124
    %vm126 = vweird.f32 %v109
    %vm127 = vweird.f32 %v120
    %vm128 = vmor %vm126, %vm127
    %v129 = vsel %vm128, %v120, %v125
    %v130 = vmul.f32 %v96, %v119
    %v131 = vmul.f32 %v97, %v129
    %v132 = vld [vmem:[%s3] sm:$0x1]
    %v134 = vperm.slane %v132, 0
    %v136 = vmul.f32 %v130, %v134
    %v137 = vmul.f32 %v131, %v134
    %v138 = vld [vmem:[%s4] sm:$0x1]
    %v140 = vperm.slane %v138, 0
    %v142 = vadd.f32 %v136, %v140
    %v143 = vadd.f32 %v137, %v140
    %144 = vst.msk [vmem:[#allocation8] sm:$0xff] %vm80, %v142
    %145 = vst.msk [vmem:[#allocation8 + $0x8] sm:$0xff] %vm80, %v143
    // Predicated region
    $region34: #{tpu_custom_call.1} parent=1 // pred_check
      _
    $region35: #{tpu_custom_call.1} parent=1 // pred_check_branch
      %147 = sbr.rel (0) target = $region37
    $region36: #{tpu_custom_call.1} parent=1 // pred_region
      %149 = vsyncadd [#allocation4], 0
      %s150 = sshll.u32 [#allocation8], 4
      %s151 = int_to_ptr.vmem [resolvable:$true] %s150
      %s152 = sshll.u32 %s5, 4
      %s153 = int_to_ptr.hbm [resolvable:$true] %s152
      %158 = dma.vmem_to_hbm [thread:$0]  %s151, 256, %s153, [#allocation4], 128, 128, 8
    $region37: #{tpu_custom_call.1} parent=1 // pred_fallthru
      _
    // Predicated region
    $region38: #{tpu_custom_call.1} parent=1 // pred_check
      _
    $region39: #{tpu_custom_call.1} parent=1 // pred_check_branch
      %160 = sbr.rel (0) target = $region41
    $region40: #{tpu_custom_call.1} parent=1 // pred_region
      %162 = dma.done [#allocation4], 256
    $region41: #{tpu_custom_call.1} parent=1 // pred_fallthru
      _
    %163 = vsyncpa [#allocation3], 1
    %164 = vsyncpa [#allocation6], 1
    %165 = vsyncpa [#allocation4], 1

</llo_original>
